<compile_context>
chip_gen: v5e
topology: v5e:2x2
jax: 0.10.0
libtpu: 0.0.40
codegen_flags: <defaults>
</compile_context>

<pallas_src>
import functools

import jax
import jax.numpy as jnp
from jax.experimental import pallas as pl
from jax.experimental.pallas import tpu as pltpu


def _round_up(x, m):
    return ((x + m - 1) // m) * m


def _pick_band(m, target):
    """Largest multiple-of-8 band size <= target that divides m (fallback m)."""
    if m <= target:
        return m
    tm = (min(target, m) // 8) * 8
    while tm >= 8:
        if m % tm == 0:
            return tm
        tm -= 8
    # TODO(synk): ragged last band (mask padded rows out of the pooled sum)
    # instead of falling back to one full-size band.
    return m


# ----------------------------------------------------------------------------
# Fused kernel: conv-as-matmul + ReLU + global avg pool + classifier
# ----------------------------------------------------------------------------
def _fused_kernel(p_ref, wc_ref, bc_ref, wcls_ref, bcls_ref, out_ref, acc_ref,
                  *, inv_hw):
    j = pl.program_id(1)

    @pl.when(j == 0)
    def _init():
        acc_ref[...] = jnp.zeros_like(acc_ref)

    # Conv band as one MXU matmul (bf16 inputs, f32 accumulation), fused
    # bias + ReLU in f32.  p_ref is already lane-dense im2col from the wrapper.
    acts = jnp.dot(p_ref[...], wc_ref[...], preferred_element_type=jnp.float32)
    acts = jnp.maximum(acts + bc_ref[...], 0.0)                # (TM, F_PAD) f32

    # Partial global-average-pool: running SUM only; scale once in epilogue.
    acc_ref[...] += jnp.sum(acts, axis=0, keepdims=True)       # (1, F_PAD)

    @pl.when(j == pl.num_programs(1) - 1)
    def _finalize():
        pooled = (acc_ref[...] * inv_hw).astype(jnp.bfloat16)  # (1, F_PAD)
        out_ref[...] = (
            jnp.dot(pooled, wcls_ref[...], preferred_element_type=jnp.float32)
            + bcls_ref[...]
        )


# ----------------------------------------------------------------------------
# Wrapper: comb=None forward -> fused conv/pool/classifier Pallas kernel
# ----------------------------------------------------------------------------
def generic_timm_model_forward(img_nchw, params, band_rows=1024):
    B, C, H, W = img_nchw.shape
    M = H * W
    K = 9 * C
    F = params["w_conv"].shape[1]
    NC = params["w_cls"].shape[1]

    K_PAD = _round_up(K, 128)
    F_PAD = _round_up(F, 128)
    NC_PAD = _round_up(NC, 128)
    TM = _pick_band(M, band_rows)
    n_bands = M // TM

    # ---- Layout plumbing (stays in XLA, outside the kernel) ----------------
    # NCHW -> NHWC, bf16, 'same' spatial padding, im2col into a lane-dense
    # (B, H*W, K_PAD) slab with the contraction zero-padded to 128 lanes.
    x_nhwc = jnp.transpose(img_nchw, (0, 2, 3, 1)).astype(jnp.bfloat16)
    x_pad = jnp.pad(x_nhwc, ((0, 0), (1, 1), (1, 1), (0, 0)))
    cols = [x_pad[:, dh:dh + H, dw:dw + W, :]
            for dh in range(3) for dw in range(3)]             # (dh, dw, c)-major
    patches = jnp.concatenate(cols, axis=-1).reshape(B, M, K)
    patches = jnp.pad(patches, ((0, 0), (0, 0), (0, K_PAD - K)))

    # Zero-padded, lane-dense weights / biases.
    w_conv = jnp.zeros((K_PAD, F_PAD), jnp.bfloat16).at[:K, :F].set(
        params["w_conv"].astype(jnp.bfloat16))
    b_conv = jnp.zeros((1, F_PAD), jnp.float32).at[:, :F].set(
        params["b_conv"].astype(jnp.float32))
    w_cls = jnp.zeros((F_PAD, NC_PAD), jnp.bfloat16).at[:F, :NC].set(
        params["w_cls"].astype(jnp.bfloat16))
    b_cls = jnp.zeros((1, NC_PAD), jnp.float32).at[:, :NC].set(
        params["b_cls"].astype(jnp.float32))

    kernel = functools.partial(_fused_kernel, inv_hw=1.0 / float(M))

    flops = 2 * B * M * K * F + 2 * B * F * NC
    bytes_accessed = (patches.size * 2 + w_conv.size * 2 + b_conv.size * 4
                      + w_cls.size * 2 + b_cls.size * 4 + B * NC_PAD * 4)

    out_padded = pl.pallas_call(
        kernel,
        out_shape=jax.ShapeDtypeStruct((B, 1, NC_PAD), jnp.float32),
        grid_spec=pltpu.PrefetchScalarGridSpec(
            num_scalar_prefetch=0,
            grid=(B, n_bands),
            in_specs=[
                # Lane-dense im2col band for this (batch, band) grid point.
                pl.BlockSpec((None, TM, K_PAD), lambda b, j: (b, j, 0)),
                # Grid-invariant weights / biases stay resident in VMEM.
                pl.BlockSpec((K_PAD, F_PAD), lambda b, j: (0, 0)),
                pl.BlockSpec((1, F_PAD), lambda b, j: (0, 0)),
                pl.BlockSpec((F_PAD, NC_PAD), lambda b, j: (0, 0)),
                pl.BlockSpec((1, NC_PAD), lambda b, j: (0, 0)),
            ],
            out_specs=pl.BlockSpec((None, 1, NC_PAD), lambda b, j: (b, 0, 0)),
            scratch_shapes=[pltpu.VMEM((1, F_PAD), jnp.float32)],
        ),
        compiler_params=pltpu.CompilerParams(
            # Batch axis is independent (megacore on v7x); the pooled-sum
            # reduction axis carries the accumulator -> arbitrary.
            dimension_semantics=("parallel", "arbitrary"),
        ),
        cost_estimate=pl.CostEstimate(
            flops=flops, transcendentals=0, bytes_accessed=bytes_accessed),
    )(patches, w_conv, b_conv, w_cls, b_cls)

    return out_padded[:, 0, :NC]


# ----------------------------------------------------------------------------
# Pure-JAX f32 reference (same math, for correctness checking)
# ----------------------------------------------------------------------------
def reference_forward(img_nchw, params):
    B, C, H, W = img_nchw.shape
    x_nhwc = jnp.transpose(img_nchw, (0, 2, 3, 1)).astype(jnp.float32)
    xp = jnp.pad(x_nhwc, ((0, 0), (1, 1), (1, 1), (0, 0)))
    cols = [xp[:, dh:dh + H, dw:dw + W, :]
            for dh in range(3) for dw in range(3)]
    patches = jnp.concatenate(cols, axis=-1).reshape(B * H * W, 9 * C)
    acts = jnp.maximum(patches @ params["w_conv"] + params["b_conv"], 0.0)
    F = params["w_conv"].shape[1]
    pooled = acts.reshape(B, H * W, F).mean(axis=1)
    return pooled @ params["w_cls"] + params["b_cls"]


if __name__ == "__main__":
    # Small shapes: batch=2, channels=4, spatial=16x16, feature maps=64, classes=8
    B, C, H, W = 2, 4, 16, 16
    F_MAPS = 64            # stand-in for n_feat_conv
    NUM_CLASS = 8

    key = jax.random.PRNGKey(0)
    k_img, k_wc, k_bc, k_wl, k_bl = jax.random.split(key, 5)

    img = jax.random.normal(k_img, (B, C, H, W), dtype=jnp.float32)

    params = {
        # im2col conv weight: (9*C, F), rows in (kh, kw, c)-major order.
        # TODO(synk): real PyTorch Conv2d weights (F, C, kH, kW) flattened as
        # weight.view(F, -1) are (c, kh, kw)-major; permute rows when loading
        # real checkpoints.
        "w_conv": jax.random.normal(k_wc, (C * 9, F_MAPS), jnp.float32) * 0.1,
        "b_conv": jax.random.normal(k_bc, (1, F_MAPS), jnp.float32) * 0.01,
        # LazyLinear(num_class) materialized with in_features = F_MAPS.
        "w_cls": jax.random.normal(k_wl, (F_MAPS, NUM_CLASS), jnp.float32) * 0.1,
        "b_cls": jax.random.normal(k_bl, (1, NUM_CLASS), jnp.float32) * 0.01,
    }

    fwd = jax.jit(generic_timm_model_forward)
    out = jax.block_until_ready(fwd(img, params))

    ref = reference_forward(img, params)
    assert out.shape == (B, NUM_CLASS), out.shape
    # bf16 matmul inputs with f32 accumulation -> loosened tolerance.
    assert jnp.allclose(out, ref, atol=2e-2, rtol=2e-2), "mismatch vs reference"

    print("KERNEL_OK")
</pallas_src>

<mosaic_0001>
module attributes {stable_mosaic.version = 11 : i64} {
  func.func @_fused_kernel(%arg0: i32, %arg1: i32, %arg2: memref<1x256x128xbf16, #tpu.memory_space<vmem>>, %arg3: memref<128x128xbf16, #tpu.memory_space<vmem>>, %arg4: memref<1x128xf32, #tpu.memory_space<vmem>>, %arg5: memref<128x128xbf16, #tpu.memory_space<vmem>>, %arg6: memref<1x128xf32, #tpu.memory_space<vmem>>, %arg7: memref<1x1x128xf32, #tpu.memory_space<vmem>>, %arg8: memref<1x128xf32, #tpu.memory_space<vmem>>) attributes {dimension_semantics = [#tpu.dimension_semantics<parallel>, #tpu.dimension_semantics<arbitrary>], iteration_bounds = array<i64: 2, 1>, scalar_prefetch = 0 : i64, scratch_operands = 1 : i64, tpu.core_type = #tpu.core_type<tc>, window_params = [{transform_indices = @transform_0, window_bounds = array<i64: 1, 256, 128>}, {pipeline_mode = #tpu.pipeline_mode<synchronous>, transform_indices = @transform_1, window_bounds = array<i64: 128, 128>}, {pipeline_mode = #tpu.pipeline_mode<synchronous>, transform_indices = @transform_2, window_bounds = array<i64: 1, 128>}, {pipeline_mode = #tpu.pipeline_mode<synchronous>, transform_indices = @transform_3, window_bounds = array<i64: 128, 128>}, {pipeline_mode = #tpu.pipeline_mode<synchronous>, transform_indices = @transform_4, window_bounds = array<i64: 1, 128>}, {transform_indices = @transform_5, window_bounds = array<i64: 1, 1, 128>}]} {
    %c0_i32 = arith.constant 0 : i32
    %0 = arith.cmpi eq, %arg1, %c0_i32 : i32
    %1 = arith.extui %0 : i1 to i32
    %c0_i32_0 = arith.constant 0 : i32
    %2 = arith.cmpi ne, %1, %c0_i32_0 : i32
    scf.if %2 {
      %cst_15 = arith.constant 0.000000e+00 : f32
      %20 = vector.broadcast %cst_15 : f32 to vector<1x128xf32>
      %c0_16 = arith.constant 0 : index
      %c0_17 = arith.constant 0 : index
      %21 = vector.load %arg8[%c0_16, %c0_17] : memref<1x128xf32, #tpu.memory_space<vmem>>, vector<1x128xf32>
      tpu.vector_store %arg8[%c0_16, %c0_17], %20 {strides = array<i32>} : memref<1x128xf32, #tpu.memory_space<vmem>>, vector<1x128xf32>,
    } else {
    }
    %c0 = arith.constant 0 : index
    %c0_1 = arith.constant 0 : index
    %c0_2 = arith.constant 0 : index
    %3 = vector.load %arg2[%c0, %c0_1, %c0_2] : memref<1x256x128xbf16, #tpu.memory_space<vmem>>, vector<1x256x128xbf16>
    %4 = vector.shape_cast %3 : vector<1x256x128xbf16> to vector<256x128xbf16>
    %c0_3 = arith.constant 0 : index
    %c0_4 = arith.constant 0 : index
    %5 = vector.load %arg3[%c0_3, %c0_4] : memref<128x128xbf16, #tpu.memory_space<vmem>>, vector<128x128xbf16>
    %cst = arith.constant dense<0.000000e+00> : vector<256x128xf32>
    %6 = tpu.matmul %4, %5, %cst {dimension_numbers = #tpu.dot_dimension_numbers<[1], [0], [0], [1], [0, 0, 1, 1], [], []>} : vector<256x128xbf16>, vector<128x128xbf16>, vector<256x128xf32> -> vector<256x128xf32>
    %c0_5 = arith.constant 0 : index
    %c0_6 = arith.constant 0 : index
    %7 = vector.load %arg4[%c0_5, %c0_6] : memref<1x128xf32, #tpu.memory_space<vmem>>, vector<1x128xf32>
    %8 = vector.broadcast %7 : vector<1x128xf32> to vector<256x128xf32>
    %9 = arith.addf %6, %8 : vector<256x128xf32>
    %cst_7 = arith.constant 0.000000e+00 : f32
    %10 = vector.broadcast %cst_7 : f32 to vector<256x128xf32>
    %11 = arith.maximumf %9, %10 : vector<256x128xf32>
    %c0_8 = arith.constant 0 : index
    %c0_9 = arith.constant 0 : index
    %12 = vector.load %arg8[%c0_8, %c0_9] : memref<1x128xf32, #tpu.memory_space<vmem>>, vector<1x128xf32>
    %cst_10 = arith.constant dense<0.000000e+00> : vector<128xf32>
    %13 = vector.multi_reduction <add>, %11, %cst_10 [0] : vector<256x128xf32> to vector<128xf32>
    %14 = vector.shape_cast %13 : vector<128xf32> to vector<1x128xf32>
    %15 = arith.addf %12, %14 : vector<1x128xf32>
    %c0_11 = arith.constant 0 : index
    %c0_12 = arith.constant 0 : index
    %16 = vector.load %arg8[%c0_11, %c0_12] : memref<1x128xf32, #tpu.memory_space<vmem>>, vector<1x128xf32>
    tpu.vector_store %arg8[%c0_11, %c0_12], %15 {strides = array<i32>} : memref<1x128xf32, #tpu.memory_space<vmem>>, vector<1x128xf32>,
    %c0_i32_13 = arith.constant 0 : i32
    %17 = arith.cmpi eq, %arg1, %c0_i32_13 : i32
    %18 = arith.extui %17 : i1 to i32
    %c0_i32_14 = arith.constant 0 : i32
    %19 = arith.cmpi ne, %18, %c0_i32_14 : i32
    scf.if %19 {
      %c0_15 = arith.constant 0 : index
      %c0_16 = arith.constant 0 : index
      %20 = vector.load %arg8[%c0_15, %c0_16] : memref<1x128xf32, #tpu.memory_space<vmem>>, vector<1x128xf32>
      %cst_17 = arith.constant 3.906250e-03 : f32
      %21 = vector.broadcast %cst_17 : f32 to vector<1x128xf32>
      %22 = arith.mulf %20, %21 : vector<1x128xf32>
      %23 = arith.truncf %22 : vector<1x128xf32> to vector<1x128xbf16>
      %c0_18 = arith.constant 0 : index
      %c0_19 = arith.constant 0 : index
      %24 = vector.load %arg5[%c0_18, %c0_19] : memref<128x128xbf16, #tpu.memory_space<vmem>>, vector<128x128xbf16>
      %cst_20 = arith.constant dense<0.000000e+00> : vector<1x128xf32>
      %25 = tpu.matmul %23, %24, %cst_20 {dimension_numbers = #tpu.dot_dimension_numbers<[1], [0], [0], [1], [0, 0, 1, 1], [], []>} : vector<1x128xbf16>, vector<128x128xbf16>, vector<1x128xf32> -> vector<1x128xf32>
      %c0_21 = arith.constant 0 : index
      %c0_22 = arith.constant 0 : index
      %26 = vector.load %arg6[%c0_21, %c0_22] : memref<1x128xf32, #tpu.memory_space<vmem>>, vector<1x128xf32>
      %27 = arith.addf %25, %26 : vector<1x128xf32>
      %c0_23 = arith.constant 0 : index
      %c0_24 = arith.constant 0 : index
      %c0_25 = arith.constant 0 : index
      %28 = vector.load %arg7[%c0_23, %c0_24, %c0_25] : memref<1x1x128xf32, #tpu.memory_space<vmem>>, vector<1x1x128xf32>
      %29 = vector.shape_cast %28 : vector<1x1x128xf32> to vector<1x128xf32>
      %30 = vector.shape_cast %27 : vector<1x128xf32> to vector<1x1x128xf32>
      tpu.vector_store %arg7[%c0_23, %c0_24, %c0_25], %30 {strides = array<i32>} : memref<1x1x128xf32, #tpu.memory_space<vmem>>, vector<1x1x128xf32>,
    } else {
    }
    return
  }
  func.func @transform_0(%arg0: i32, %arg1: i32) -> (i32, i32, i32) {
    %c0_i32 = arith.constant 0 : i32
    %c0_i32_0 = arith.constant 0 : i32
    return %arg0, %arg1, %c0_i32 : i32, i32, i32
  }
  func.func @transform_1(%arg0: i32, %arg1: i32) -> (i32, i32) {
    %c0_i32 = arith.constant 0 : i32
    %c0_i32_0 = arith.constant 0 : i32
    %c0_i32_1 = arith.constant 0 : i32
    return %c0_i32, %c0_i32_0 : i32, i32
  }
  func.func @transform_2(%arg0: i32, %arg1: i32) -> (i32, i32) {
    %c0_i32 = arith.constant 0 : i32
    %c0_i32_0 = arith.constant 0 : i32
    %c0_i32_1 = arith.constant 0 : i32
    return %c0_i32, %c0_i32_0 : i32, i32
  }
  func.func @transform_3(%arg0: i32, %arg1: i32) -> (i32, i32) {
    %c0_i32 = arith.constant 0 : i32
    %c0_i32_0 = arith.constant 0 : i32
    %c0_i32_1 = arith.constant 0 : i32
    return %c0_i32, %c0_i32_0 : i32, i32
  }
  func.func @transform_4(%arg0: i32, %arg1: i32) -> (i32, i32) {
    %c0_i32 = arith.constant 0 : i32
    %c0_i32_0 = arith.constant 0 : i32
    %c0_i32_1 = arith.constant 0 : i32
    return %c0_i32, %c0_i32_0 : i32, i32
  }
  func.func @transform_5(%arg0: i32, %arg1: i32) -> (i32, i32, i32) {
    %c0_i32 = arith.constant 0 : i32
    %c0_i32_0 = arith.constant 0 : i32
    %c0_i32_1 = arith.constant 0 : i32
    return %arg0, %c0_i32, %c0_i32_0 : i32, i32, i32
  }
}

</mosaic_0001>

<llo_original>
// kernel: generic_timm_model_forward.1
$region0: #{generic_timm_model_forward.1}
  #allocation0 [shape = 'u32[]', space=smem, size = 0x4, offset = 0x4, fixed_abs, tag = 'smem constant byte address 0x4 - core index']
  #allocation1 [shape = 'u32[72,128]{1,0:T(1,128)}', space=vmem, size = 0x9000, scoped, tag = 'internal scratch']
  #allocation2 [shape = 'f32[1,128]{1,0:T(1,128)}', space=vmem, size = 0x200, scoped, tag = 'scratch operand']
  %s0 = inlined_call_operand.vmem [shape: bf16[2,256,128], index: 0, kind: input, shape index: {}]
  %s1 = inlined_call_operand.vmem [shape: bf16[128,128], index: 1, kind: input, shape index: {}]
  %s2 = inlined_call_operand.vmem [shape: f32[1,128], index: 2, kind: input, shape index: {}]
  %s3 = inlined_call_operand.vmem [shape: bf16[128,128], index: 3, kind: input, shape index: {}]
  %s4 = inlined_call_operand.vmem [shape: f32[1,128], index: 4, kind: input, shape index: {}]
  %s5 = inlined_call_operand.hbm [shape: f32[2,1,128], index: 5, kind: output, shape index: {}]
  %s6 = sld [smem:[#allocation0]]
  $region61: #{generic_timm_model_forward.1} parent=0
    _
  %s8 = ssub.s32 1, %s6
  %s9 = scalar_select 0, %s8, %s6
  $region1: #{generic_timm_model_forward.1} parent=0
    #allocation3 [shape = 'u8[1024]{0}', space=vmem, size = 0x400, scoped, tag = 'output window, operand 0']
    #allocation4 [shape = 's32[2]{0}', space=sflag, size = 0x8, scoped, tag = 'scoped memory for generic_timm_model_forward.1']
    %10 = vsyncpa [#allocation4], 0
    %s11 = scalar_lea.sflag [#allocation4], 1
    %12 = vsyncpa %s11, 0
    loop: start=0, step=1, limit=4
    $region2: #{generic_timm_model_forward.1} parent=1 // loop_pre_header
      _
    $region3: #{generic_timm_model_forward.1} parent=1 // loop_header
      %s14 = sphi 0, %s18
      %p15 = scmp.ge.s32.totalorder %s14, 4
      %s21 = sphi 0, %s33
      %s22 = sphi 0, %s29
      %s23 = sphi 0, %s21
      %s24 = sphi 0, %s22
      %s25 = sphi 0, %s23
      %s26 = sphi 0, %s24
      %s38 = sphi 0, %s40
      %s41 = sphi 0, %s38
      %s42 = sphi 0, %s41
      %s58 = sphi 0, %s42
      %s62 = sphi 0, %s62
      %s64 = sphi 0, %s62
      %s65 = sphi 0, %s64
      %s79 = sphi 0, %s65
      %s83 = sphi 0, %s83
      %s85 = sphi 0, %s83
      %s86 = sphi 0, %s85
      %s100 = sphi 0, %s86
      %s104 = sphi 0, %s104
      %s106 = sphi 0, %s104
      %s107 = sphi 0, %s106
      %s121 = sphi 0, %s107
      %s125 = sphi 0, %s125
      %s127 = sphi 0, %s125
      %s128 = sphi 0, %s127
      %s142 = sphi 0, %s128
      %s148 = sphi 0, %s150
      %s151 = sphi 0, %s148
      %s152 = sphi 0, %s151
      %s168 = sphi 0, %s152
    $region4: #{generic_timm_model_forward.1} parent=1 // loop_header_branch
      %17 = sbr.rel (%p15) target = $region8
    $region5: #{generic_timm_model_forward.1} parent=1 // loop_body
      %s19 = ssub.s32 %s14, 1
      %s20 = ssub.s32 %s14, 2
      %s27 = sadd.s32 1, %s22
      %p28 = scmp.ge.s32.totalorder %s27, 1
      %s29 = scalar_select %p28, 0, %s27
      %s30 = sadd.s32 1, %s21
      %s31 = scalar_select %p28, %s30, %s21
      %p32 = scmp.ge.s32.totalorder %s31, 2
      %s33 = scalar_select %p32, 0, %s31
      %s34 = ssub.s32 %s21, %s33
      %s35 = ssub.s32 %s22, %s29
      %s36 = sor.u32 %s34, %s35
      %p37 = scmp.eq.s32.totalorder %s36, 0
      %s39 = sadd.s32 %s38, 1
      %s40 = scalar_select %p37, %s38, %s39
      %p43 = pneg %p37
      %p44 = scmp.eq.s32.totalorder %s14, 1
      %p45 = por %p43, %p44
      %p46 = scmp.ne.s32.totalorder %s38, %s41
      %p47 = scmp.eq.s32.totalorder %s14, 0
      %p48 = por %p46, %p47
      %p49 = scmp.ne.s32.totalorder %s38, %s41
      %p50 = scmp.eq.s32.totalorder %s19, 1
      %p51 = por %p49, %p50
      %p52 = scmp.ne.s32.totalorder %s41, %s42
      %p53 = scmp.eq.s32.totalorder %s19, 0
      %p54 = por %p52, %p53
      %p55 = scmp.ne.s32.totalorder %s41, %s42
      %p56 = scmp.eq.s32.totalorder %s20, 1
      %p57 = por %p55, %p56
      %p59 = scmp.ne.s32.totalorder %s42, %s58
      %p60 = scmp.eq.s32.totalorder %s20, 0
      %p61 = por %p59, %p60
      %s63 = sadd.s32 %s62, 1
      %p66 = scmp.eq.s32.totalorder %s14, 1
      %p67 = scmp.ne.s32.totalorder %s62, %s64
      %p68 = scmp.eq.s32.totalorder %s14, 0
      %p69 = por %p67, %p68
      %p70 = scmp.ne.s32.totalorder %s62, %s64
      %p71 = scmp.eq.s32.totalorder %s19, 1
      %p72 = por %p70, %p71
      %p73 = scmp.ne.s32.totalorder %s64, %s65
      %p74 = scmp.eq.s32.totalorder %s19, 0
      %p75 = por %p73, %p74
      %p76 = scmp.ne.s32.totalorder %s64, %s65
      %p77 = scmp.eq.s32.totalorder %s20, 1
      %p78 = por %p76, %p77
      %p80 = scmp.ne.s32.totalorder %s65, %s79
      %p81 = scmp.eq.s32.totalorder %s20, 0
      %p82 = por %p80, %p81
      %s84 = sadd.s32 %s83, 1
      %p87 = scmp.eq.s32.totalorder %s14, 1
      %p88 = scmp.ne.s32.totalorder %s83, %s85
      %p89 = scmp.eq.s32.totalorder %s14, 0
      %p90 = por %p88, %p89
      %p91 = scmp.ne.s32.totalorder %s83, %s85
      %p92 = scmp.eq.s32.totalorder %s19, 1
      %p93 = por %p91, %p92
      %p94 = scmp.ne.s32.totalorder %s85, %s86
      %p95 = scmp.eq.s32.totalorder %s19, 0
      %p96 = por %p94, %p95
      %p97 = scmp.ne.s32.totalorder %s85, %s86
      %p98 = scmp.eq.s32.totalorder %s20, 1
      %p99 = por %p97, %p98
      %p101 = scmp.ne.s32.totalorder %s86, %s100
      %p102 = scmp.eq.s32.totalorder %s20, 0
      %p103 = por %p101, %p102
      %s105 = sadd.s32 %s104, 1
      %p108 = scmp.eq.s32.totalorder %s14, 1
      %p109 = scmp.ne.s32.totalorder %s104, %s106
      %p110 = scmp.eq.s32.totalorder %s14, 0
      %p111 = por %p109, %p110
      %p112 = scmp.ne.s32.totalorder %s104, %s106
      %p113 = scmp.eq.s32.totalorder %s19, 1
      %p114 = por %p112, %p113
      %p115 = scmp.ne.s32.totalorder %s106, %s107
      %p116 = scmp.eq.s32.totalorder %s19, 0
      %p117 = por %p115, %p116
      %p118 = scmp.ne.s32.totalorder %s106, %s107
      %p119 = scmp.eq.s32.totalorder %s20, 1
      %p120 = por %p118, %p119
      %p122 = scmp.ne.s32.totalorder %s107, %s121
      %p123 = scmp.eq.s32.totalorder %s20, 0
      %p124 = por %p122, %p123
      %s126 = sadd.s32 %s125, 1
      %p129 = scmp.eq.s32.totalorder %s14, 1
      %p130 = scmp.ne.s32.totalorder %s125, %s127
      %p131 = scmp.eq.s32.totalorder %s14, 0
      %p132 = por %p130, %p131
      %p133 = scmp.ne.s32.totalorder %s125, %s127
      %p134 = scmp.eq.s32.totalorder %s19, 1
      %p135 = por %p133, %p134
      %p136 = scmp.ne.s32.totalorder %s127, %s128
      %p137 = scmp.eq.s32.totalorder %s19, 0
      %p138 = por %p136, %p137
      %p139 = scmp.ne.s32.totalorder %s127, %s128
      %p140 = scmp.eq.s32.totalorder %s20, 1
      %p141 = por %p139, %p140
      %p143 = scmp.ne.s32.totalorder %s128, %s142
      %p144 = scmp.eq.s32.totalorder %s20, 0
      %p145 = por %p143, %p144
      %s146 = ssub.s32 %s21, %s33
      %p147 = scmp.eq.s32.totalorder %s146, 0
      %s149 = sadd.s32 %s148, 1
      %s150 = scalar_select %p147, %s148, %s149
      %p153 = pneg %p147
      %p154 = scmp.eq.s32.totalorder %s14, 1
      %p155 = por %p153, %p154
      %p156 = scmp.ne.s32.totalorder %s148, %s151
      %p157 = scmp.eq.s32.totalorder %s14, 0
      %p158 = por %p156, %p157
      %p159 = scmp.ne.s32.totalorder %s148, %s151
      %p160 = scmp.eq.s32.totalorder %s19, 1
      %p161 = por %p159, %p160
      %p162 = scmp.ne.s32.totalorder %s151, %s152
      %p163 = scmp.eq.s32.totalorder %s19, 0
      %p164 = por %p162, %p163
      %p165 = scmp.ne.s32.totalorder %s151, %s152
      %p166 = scmp.eq.s32.totalorder %s20, 1
      %p167 = por %p165, %p166
      %p169 = scmp.ne.s32.totalorder %s152, %s168
      %p170 = scmp.eq.s32.totalorder %s20, 0
      %p171 = por %p169, %p170
      %p172 = scmp.le.s32.totalorder 1, %s14
      %p173 = scmp.lt.s32.totalorder %s14, 3
      %p174 = pnand %p172, %p173
      %p175 = pneg %p174
      // Predicated region
      $region9: #{generic_timm_model_forward.1} parent=5 // pred_check
        _
      $region10: #{generic_timm_model_forward.1} parent=5 // pred_check_branch
        %177 = sbr.rel (%p174) target = $region12
      $region11: #{generic_timm_model_forward.1} parent=5 // pred_region
        %s178 = ssub.s32 %s14, 1
        // Predicated region
        $region13: #{generic_timm_model_forward.1} parent=11 // pred_check
          %p179 = pneg %p75
        $region14: #{generic_timm_model_forward.1} parent=11 // pred_check_branch
          %181 = sbr.rel (%p179) target = $region16
        $region15: #{generic_timm_model_forward.1} parent=11 // pred_region
          _
        $region16: #{generic_timm_model_forward.1} parent=11 // pred_fallthru
          _
        // Predicated region
        $region17: #{generic_timm_model_forward.1} parent=11 // pred_check
          %p182 = pneg %p96
        $region18: #{generic_timm_model_forward.1} parent=11 // pred_check_branch
          %184 = sbr.rel (%p182) target = $region20
        $region19: #{generic_timm_model_forward.1} parent=11 // pred_region
          _
        $region20: #{generic_timm_model_forward.1} parent=11 // pred_fallthru
          _
        // Predicated region
        $region21: #{generic_timm_model_forward.1} parent=11 // pred_check
          %p185 = pneg %p117
        $region22: #{generic_timm_model_forward.1} parent=11 // pred_check_branch
          %187 = sbr.rel (%p185) target = $region24
        $region23: #{generic_timm_model_forward.1} parent=11 // pred_region
          _
        $region24: #{generic_timm_model_forward.1} parent=11 // pred_fallthru
          _
        // Predicated region
        $region25: #{generic_timm_model_forward.1} parent=11 // pred_check
          %p188 = pneg %p138
        $region26: #{generic_timm_model_forward.1} parent=11 // pred_check_branch
          %190 = sbr.rel (%p188) target = $region28
        $region27: #{generic_timm_model_forward.1} parent=11 // pred_region
          _
        $region28: #{generic_timm_model_forward.1} parent=11 // pred_fallthru
          _
      $region12: #{generic_timm_model_forward.1} parent=5 // pred_fallthru
        _
      %p191 = scmp.lt.s32.totalorder %s14, 2
      // Predicated region
      $region29: #{generic_timm_model_forward.1} parent=5 // pred_check
        %p192 = pneg %p191
      $region30: #{generic_timm_model_forward.1} parent=5 // pred_check_branch
        %194 = sbr.rel (%p192) target = $region32
      $region31: #{generic_timm_model_forward.1} parent=5 // pred_region
        // Predicated region
        $region33: #{generic_timm_model_forward.1} parent=31 // pred_check
          %p195 = pneg %p48
        $region34: #{generic_timm_model_forward.1} parent=31 // pred_check_branch
          %197 = sbr.rel (%p195) target = $region36
        $region35: #{generic_timm_model_forward.1} parent=31 // pred_region
          %s198 = smul.u32 32, %s22
          %p199 = scmp.lt.s32.totalorder %s21, 1
          %s200 = scalar_select %p199, %s21, 1
          %p201 = scmp.lt.s32.totalorder %s198, 31
          %s202 = scalar_select %p201, %s198, 31
          %s203 = smul.addr %s200, 32
          %s204 = sadd.s32 %s202, %s203
          %s205 = smul.addr %s204, 4
          %s206 = scalar_lea.vmem %s0, %s205
          %s207 = smul.u32 32, %s22
        $region36: #{generic_timm_model_forward.1} parent=31 // pred_fallthru
          _
      $region32: #{generic_timm_model_forward.1} parent=5 // pred_fallthru
        _
      %p208 = scmp.le.s32.totalorder 1, %s14
      %p209 = scmp.lt.s32.totalorder %s14, 3
      %p210 = pnand %p208, %p209
      %p211 = pneg %p210
      // Predicated region
      $region37: #{generic_timm_model_forward.1} parent=5 // pred_check
        _
      $region38: #{generic_timm_model_forward.1} parent=5 // pred_check_branch
        %213 = sbr.rel (%p210) target = $region40
      $region39: #{generic_timm_model_forward.1} parent=5 // pred_region
        %s214 = ssub.s32 %s14, 1
        %s215 = smul.u32 32, %s24
        %p216 = scmp.lt.s32.totalorder %s23, 1
        %s217 = scalar_select %p216, %s23, 1
        %p218 = scmp.lt.s32.totalorder %s215, 31
        %s219 = scalar_select %p218, %s215, 31
        %s220 = smul.addr %s217, 32
        %s221 = sadd.s32 %s219, %s220
        %s222 = smul.addr %s221, 4
        %s223 = scalar_lea.vmem %s0, %s222
        %p224 = pneg %p54
        %p225 = pneg %p51
        %p226 = pneg %p75
        %p227 = pneg %p72
        %p228 = pneg %p96
        %p229 = pneg %p93
        %p230 = pneg %p117
        %p231 = pneg %p114
        %p232 = pneg %p138
        %p233 = pneg %p135
        %p234 = pneg %p164
        %p235 = pneg %p161
        %s236 = sand.u32 %s151, 1
        %s237 = scalar_lea.sflag [#allocation4], %s236
        %s238 = sand.u32 %s151, 1
        %s239 = scalar_lea.vmem [#allocation3], %s238
        %s240 = smul.u32 32, %s24
        %p241 = scmp.lt.s32.totalorder %s23, 1
        %s242 = scalar_select %p241, %s23, 1
        %p243 = scmp.lt.s32.totalorder %s240, 31
        %s244 = scalar_select %p243, %s240, 31
        %s245 = smul.addr %s242, 32
        %s246 = sadd.s32 %s244, %s245
        %s247 = smul.addr %s246, 4
        %s248 = scalar_lea.vmem %s0, %s247
        %s249 = smul.u32 32, %s24
        %p250 = scmp.eq.s32.totalorder %s24, 0
        // Predicated region
        $region41: #{generic_timm_model_forward.1} parent=39 // pred_check
          %p251 = pneg %p250
        $region42: #{generic_timm_model_forward.1} parent=39 // pred_check_branch
          %253 = sbr.rel (%p251) target = $region44
        $region43: #{generic_timm_model_forward.1} parent=39 // pred_region
          %254 = vst [vmem:[#allocation2] sm:$0x1] 0.0
        $region44: #{generic_timm_model_forward.1} parent=39 // pred_fallthru
          _
        %v255 = vld [vmem:[%s248] sm:$0xf]
        %v256 = vld [vmem:[%s248 + $0x4] sm:$0xf]
        %v257 = vld [vmem:[%s248 + $0x8] sm:$0xf]
        %v258 = vld [vmem:[%s248 + $0xc] sm:$0xf]
        %v259 = vld [vmem:[%s248 + $0x10] sm:$0xf]
        %v260 = vld [vmem:[%s248 + $0x14] sm:$0xf]
        %v261 = vld [vmem:[%s248 + $0x18] sm:$0xf]
        %v262 = vld [vmem:[%s248 + $0x1c] sm:$0xf]
        %v263 = vld [vmem:[%s248 + $0x20] sm:$0xf]
        %v264 = vld [vmem:[%s248 + $0x24] sm:$0xf]
        %v265 = vld [vmem:[%s248 + $0x28] sm:$0xf]
        %v266 = vld [vmem:[%s248 + $0x2c] sm:$0xf]
        %v267 = vld [vmem:[%s248 + $0x30] sm:$0xf]
        %v268 = vld [vmem:[%s248 + $0x34] sm:$0xf]
        %v269 = vld [vmem:[%s248 + $0x38] sm:$0xf]
        %v270 = vld [vmem:[%s248 + $0x3c] sm:$0xf]
        %v271 = vld [vmem:[%s248 + $0x40] sm:$0xf]
        %v272 = vld [vmem:[%s248 + $0x44] sm:$0xf]
        %v273 = vld [vmem:[%s248 + $0x48] sm:$0xf]
        %v274 = vld [vmem:[%s248 + $0x4c] sm:$0xf]
        %v275 = vld [vmem:[%s248 + $0x50] sm:$0xf]
        %v276 = vld [vmem:[%s248 + $0x54] sm:$0xf]
        %v277 = vld [vmem:[%s248 + $0x58] sm:$0xf]
        %v278 = vld [vmem:[%s248 + $0x5c] sm:$0xf]
        %v279 = vld [vmem:[%s248 + $0x60] sm:$0xf]
        %v280 = vld [vmem:[%s248 + $0x64] sm:$0xf]
        %v281 = vld [vmem:[%s248 + $0x68] sm:$0xf]
        %v282 = vld [vmem:[%s248 + $0x6c] sm:$0xf]
        %v283 = vld [vmem:[%s248 + $0x70] sm:$0xf]
        %v284 = vld [vmem:[%s248 + $0x74] sm:$0xf]
        %v285 = vld [vmem:[%s248 + $0x78] sm:$0xf]
        %v286 = vld [vmem:[%s248 + $0x7c] sm:$0xf]
        %v287 = vld [vmem:[%s1] sm:$0xf]
        %v288 = vld [vmem:[%s1 + $0x4] sm:$0xf]
        %v289 = vld [vmem:[%s1 + $0x8] sm:$0xf]
        %v290 = vld [vmem:[%s1 + $0xc] sm:$0xf]
        %v291 = vld [vmem:[%s1 + $0x10] sm:$0xf]
        %v292 = vld [vmem:[%s1 + $0x14] sm:$0xf]
        %v293 = vld [vmem:[%s1 + $0x18] sm:$0xf]
        %v294 = vld [vmem:[%s1 + $0x1c] sm:$0xf]
        %v295 = vld [vmem:[%s1 + $0x20] sm:$0xf]
        %v296 = vld [vmem:[%s1 + $0x24] sm:$0xf]
        %v297 = vld [vmem:[%s1 + $0x28] sm:$0xf]
        %v298 = vld [vmem:[%s1 + $0x2c] sm:$0xf]
        %v299 = vld [vmem:[%s1 + $0x30] sm:$0xf]
        %v300 = vld [vmem:[%s1 + $0x34] sm:$0xf]
        %v301 = vld [vmem:[%s1 + $0x38] sm:$0xf]
        %v302 = vld [vmem:[%s1 + $0x3c] sm:$0xf]
        %v303 = vld [vmem:[%s2] sm:$0x1]
        %v305 = vperm.slane %v303, 0
        %v339 = vunpack.c.l.b16 %v255
        %v340 = vunpack.c.l.b16 %v256
        %v341 = vunpack.c.l.b16 %v257
        %v342 = vunpack.c.l.b16 %v258
        %v343 = vunpack.c.l.b16 %v259
        %v344 = vunpack.c.l.b16 %v260
        %v345 = vunpack.c.l.b16 %v261
        %v346 = vunpack.c.l.b16 %v262
        %v347 = vunpack.c.l.b16 %v263
        %v348 = vunpack.c.l.b16 %v264
        %v349 = vunpack.c.l.b16 %v265
        %v350 = vunpack.c.l.b16 %v266
        %v351 = vunpack.c.l.b16 %v267
        %v352 = vunpack.c.l.b16 %v268
        %v353 = vunpack.c.l.b16 %v269
        %v354 = vunpack.c.l.b16 %v270
        %v355 = vunpack.c.l.b16 %v271
        %v356 = vunpack.c.l.b16 %v272
        %v357 = vunpack.c.l.b16 %v273
        %v358 = vunpack.c.l.b16 %v274
        %v359 = vunpack.c.l.b16 %v275
        %v360 = vunpack.c.l.b16 %v276
        %v361 = vunpack.c.l.b16 %v277
        %v362 = vunpack.c.l.b16 %v278
        %v363 = vunpack.c.l.b16 %v279
        %v364 = vunpack.c.l.b16 %v280
        %v365 = vunpack.c.l.b16 %v281
        %v366 = vunpack.c.l.b16 %v282
        %v367 = vunpack.c.l.b16 %v283
        %v368 = vunpack.c.l.b16 %v284
        %v369 = vunpack.c.l.b16 %v285
        %v370 = vunpack.c.l.b16 %v286
        %v371 = vpack.c.b16 %v340, %v339
        %v372 = vpack.c.b16 %v342, %v341
        %v373 = vpack.c.b16 %v344, %v343
        %v374 = vpack.c.b16 %v346, %v345
        %v375 = vpack.c.b16 %v348, %v347
        %v376 = vpack.c.b16 %v350, %v349
        %v377 = vpack.c.b16 %v352, %v351
        %v378 = vpack.c.b16 %v354, %v353
        %v379 = vpack.c.b16 %v356, %v355
        %v380 = vpack.c.b16 %v358, %v357
        %v381 = vpack.c.b16 %v360, %v359
        %v382 = vpack.c.b16 %v362, %v361
        %v383 = vpack.c.b16 %v364, %v363
        %v384 = vpack.c.b16 %v366, %v365
        %v385 = vpack.c.b16 %v368, %v367
        %v386 = vpack.c.b16 %v370, %v369
        %v419 = vunpack.c.l.b16 %v287
        %v420 = vunpack.c.l.b16 %v288
        %v421 = vunpack.c.l.b16 %v289
        %v422 = vunpack.c.l.b16 %v290
        %v423 = vunpack.c.l.b16 %v291
        %v424 = vunpack.c.l.b16 %v292
        %v425 = vunpack.c.l.b16 %v293
        %v426 = vunpack.c.l.b16 %v294
        %v427 = vunpack.c.l.b16 %v295
        %v428 = vunpack.c.l.b16 %v296
        %v429 = vunpack.c.l.b16 %v297
        %v430 = vunpack.c.l.b16 %v298
        %v431 = vunpack.c.l.b16 %v299
        %v432 = vunpack.c.l.b16 %v300
        %v433 = vunpack.c.l.b16 %v301
        %v434 = vunpack.c.l.b16 %v302
        %v435 = vpack.c.b16 %v420, %v419
        %v436 = vpack.c.b16 %v422, %v421
        %v437 = vpack.c.b16 %v424, %v423
        %v438 = vpack.c.b16 %v426, %v425
        %v439 = vpack.c.b16 %v428, %v427
        %v440 = vpack.c.b16 %v430, %v429
        %v441 = vpack.c.b16 %v432, %v431
        %v442 = vpack.c.b16 %v434, %v433
        %451 = vmatpush.bf16.msra.mxu0 %v442
        %452 = vmatpush.bf16.msra.mxu0 %v441
        %453 = vmatpush.bf16.msra.mxu0 %v440
        %454 = vmatpush.bf16.msra.mxu0 %v439
        %455 = vmatpush.bf16.msra.mxu0 %v438
        %456 = vmatpush.bf16.msra.mxu0 %v437
        %457 = vmatpush.bf16.msra.mxu0 %v436
        %458 = vmatpush.bf16.msra.mxu0 %v435
        %459 = vmatmul.bf16.gmra.mxu0 %v371
        %v460 = vpop.f32.mrf.mxu0
        %v461 = vadd.f32 %v305, %v460
        %v462 = vpop.f32.mrf.mxu0
        %v463 = vadd.f32 %v305, %v462
        %464 = vmatmul.bf16.gmra.mxu0 %v372
        %v465 = vpop.f32.mrf.mxu0
        %v466 = vadd.f32 %v305, %v465
        %v467 = vpop.f32.mrf.mxu0
        %v468 = vadd.f32 %v305, %v467
        %469 = vmatmul.bf16.gmra.mxu0 %v373
        %v470 = vpop.f32.mrf.mxu0
        %v471 = vadd.f32 %v305, %v470
        %v472 = vpop.f32.mrf.mxu0
        %v473 = vadd.f32 %v305, %v472
        %474 = vmatmul.bf16.gmra.mxu0 %v374
        %v475 = vpop.f32.mrf.mxu0
        %v476 = vadd.f32 %v305, %v475
        %v477 = vpop.f32.mrf.mxu0
        %v478 = vadd.f32 %v305, %v477
        %479 = vmatmul.bf16.gmra.mxu0 %v375
        %v480 = vpop.f32.mrf.mxu0
        %v481 = vadd.f32 %v305, %v480
        %v482 = vpop.f32.mrf.mxu0
        %v483 = vadd.f32 %v305, %v482
        %484 = vmatmul.bf16.gmra.mxu0 %v376
        %v485 = vpop.f32.mrf.mxu0
        %v486 = vadd.f32 %v305, %v485
        %v487 = vpop.f32.mrf.mxu0
        %v488 = vadd.f32 %v305, %v487
        %489 = vmatmul.bf16.gmra.mxu0 %v377
        %v490 = vpop.f32.mrf.mxu0
        %v491 = vadd.f32 %v305, %v490
        %v492 = vpop.f32.mrf.mxu0
        %v493 = vadd.f32 %v305, %v492
        %494 = vmatmul.bf16.gmra.mxu0 %v378
        %v495 = vpop.f32.mrf.mxu0
        %v496 = vadd.f32 %v305, %v495
        %v497 = vpop.f32.mrf.mxu0
        %v498 = vadd.f32 %v305, %v497
        %499 = vmatmul.bf16.gmra.mxu0 %v379
        %v500 = vpop.f32.mrf.mxu0
        %v501 = vadd.f32 %v305, %v500
        %v502 = vpop.f32.mrf.mxu0
        %v503 = vadd.f32 %v305, %v502
        %504 = vmatmul.bf16.gmra.mxu0 %v380
        %v505 = vpop.f32.mrf.mxu0
        %v506 = vadd.f32 %v305, %v505
        %v507 = vpop.f32.mrf.mxu0
        %v508 = vadd.f32 %v305, %v507
        %509 = vmatmul.bf16.gmra.mxu0 %v381
        %v510 = vpop.f32.mrf.mxu0
        %v511 = vadd.f32 %v305, %v510
        %v512 = vpop.f32.mrf.mxu0
        %v513 = vadd.f32 %v305, %v512
        %514 = vmatmul.bf16.gmra.mxu0 %v382
        %v515 = vpop.f32.mrf.mxu0
        %v516 = vadd.f32 %v305, %v515
        %v517 = vpop.f32.mrf.mxu0
        %v518 = vadd.f32 %v305, %v517
        %519 = vmatmul.bf16.gmra.mxu0 %v383
        %v520 = vpop.f32.mrf.mxu0
        %v521 = vadd.f32 %v305, %v520
        %v522 = vpop.f32.mrf.mxu0
        %v523 = vadd.f32 %v305, %v522
        %524 = vmatmul.bf16.gmra.mxu0 %v384
        %v525 = vpop.f32.mrf.mxu0
        %v526 = vadd.f32 %v305, %v525
        %v527 = vpop.f32.mrf.mxu0
        %v528 = vadd.f32 %v305, %v527
        %529 = vmatmul.bf16.gmra.mxu0 %v385
        %v530 = vpop.f32.mrf.mxu0
        %v531 = vadd.f32 %v305, %v530
        %v532 = vpop.f32.mrf.mxu0
        %v533 = vadd.f32 %v305, %v532
        %534 = vmatmul.bf16.gmra.mxu0 %v386
        %v535 = vpop.f32.mrf.mxu0
        %v536 = vadd.f32 %v305, %v535
        %v537 = vpop.f32.mrf.mxu0
        %v538 = vadd.f32 %v305, %v537
        %539 = vdwg.mxu0
        %v540 = vmax.f32 %v461, 0.0
        %v541 = vmax.f32 %v463, 0.0
        %v542 = vmax.f32 %v466, 0.0
        %v543 = vmax.f32 %v468, 0.0
        %v544 = vmax.f32 %v471, 0.0
        %v545 = vmax.f32 %v473, 0.0
        %v546 = vmax.f32 %v476, 0.0
        %v547 = vmax.f32 %v478, 0.0
        %v548 = vmax.f32 %v481, 0.0
        %v549 = vmax.f32 %v483, 0.0
        %v550 = vmax.f32 %v486, 0.0
        %v551 = vmax.f32 %v488, 0.0
        %v552 = vmax.f32 %v491, 0.0
        %v553 = vmax.f32 %v493, 0.0
        %v554 = vmax.f32 %v496, 0.0
        %v555 = vmax.f32 %v498, 0.0
        %v556 = vmax.f32 %v501, 0.0
        %v557 = vmax.f32 %v503, 0.0
        %v558 = vmax.f32 %v506, 0.0
        %v559 = vmax.f32 %v508, 0.0
        %v560 = vmax.f32 %v511, 0.0
        %v561 = vmax.f32 %v513, 0.0
        %v562 = vmax.f32 %v516, 0.0
        %v563 = vmax.f32 %v518, 0.0
        %v564 = vmax.f32 %v521, 0.0
        %v565 = vmax.f32 %v523, 0.0
        %v566 = vmax.f32 %v526, 0.0
        %v567 = vmax.f32 %v528, 0.0
        %v568 = vmax.f32 %v531, 0.0
        %v569 = vmax.f32 %v533, 0.0
        %v570 = vmax.f32 %v536, 0.0
        %v571 = vmax.f32 %v538, 0.0
        %v572 = vld [vmem:[#allocation2] sm:$0x1]
        %v573 = vadd.f32 %v540, %v541
        %v574 = vadd.f32 %v573, %v542
        %v575 = vadd.f32 %v574, %v543
        %v576 = vadd.f32 %v575, %v544
        %v577 = vadd.f32 %v576, %v545
        %v578 = vadd.f32 %v577, %v546
        %v579 = vadd.f32 %v578, %v547
        %v580 = vadd.f32 %v579, %v548
        %v581 = vadd.f32 %v580, %v549
        %v582 = vadd.f32 %v581, %v550
        %v583 = vadd.f32 %v582, %v551
        %v584 = vadd.f32 %v583, %v552
        %v585 = vadd.f32 %v584, %v553
        %v586 = vadd.f32 %v585, %v554
        %v587 = vadd.f32 %v586, %v555
        %v588 = vadd.f32 %v587, %v556
        %v589 = vadd.f32 %v588, %v557
        %v590 = vadd.f32 %v589, %v558
        %v591 = vadd.f32 %v590, %v559
        %v592 = vadd.f32 %v591, %v560
        %v593 = vadd.f32 %v592, %v561
        %v594 = vadd.f32 %v593, %v562
        %v595 = vadd.f32 %v594, %v563
        %v596 = vadd.f32 %v595, %v564
        %v597 = vadd.f32 %v596, %v565
        %v598 = vadd.f32 %v597, %v566
        %v599 = vadd.f32 %v598, %v567
        %v600 = vadd.f32 %v599, %v568
        %v601 = vadd.f32 %v600, %v569
        %v602 = vadd.f32 %v601, %v570
        %v603 = vadd.f32 %v602, %v571
        %v604 = vrot.slane %v603, 4
        %v605 = vadd.f32 %v603, %v604
        %v606 = vrot.slane %v605, 2
        %v607 = vadd.f32 %v605, %v606
        %v608 = vrot.slane %v607, 1
        %v609 = vadd.f32 %v607, %v608
        %v610 = vadd.f32 %v572, %v609
        %611 = vst [vmem:[#allocation2] sm:$0x1] %v610
        // Predicated region
        $region45: #{generic_timm_model_forward.1} parent=39 // pred_check
          %p612 = pneg %p250
        $region46: #{generic_timm_model_forward.1} parent=39 // pred_check_branch
          %614 = sbr.rel (%p612) target = $region48
        $region47: #{generic_timm_model_forward.1} parent=39 // pred_region
          %v615 = vld [vmem:[#allocation2] sm:$0x1]
          %v616 = vmul.f32 %v615, 0.00390625
          %v617 = vpack.c.bf16 %v616, %v616
          %v618 = vld [vmem:[%s3] sm:$0xf]
          %v619 = vld [vmem:[%s3 + $0x4] sm:$0xf]
          %v620 = vld [vmem:[%s3 + $0x8] sm:$0xf]
          %v621 = vld [vmem:[%s3 + $0xc] sm:$0xf]
          %v622 = vld [vmem:[%s3 + $0x10] sm:$0xf]
          %v623 = vld [vmem:[%s3 + $0x14] sm:$0xf]
          %v624 = vld [vmem:[%s3 + $0x18] sm:$0xf]
          %v625 = vld [vmem:[%s3 + $0x1c] sm:$0xf]
          %v626 = vld [vmem:[%s3 + $0x20] sm:$0xf]
          %v627 = vld [vmem:[%s3 + $0x24] sm:$0xf]
          %v628 = vld [vmem:[%s3 + $0x28] sm:$0xf]
          %v629 = vld [vmem:[%s3 + $0x2c] sm:$0xf]
          %v630 = vld [vmem:[%s3 + $0x30] sm:$0xf]
          %v631 = vld [vmem:[%s3 + $0x34] sm:$0xf]
          %v632 = vld [vmem:[%s3 + $0x38] sm:$0xf]
          %v633 = vld [vmem:[%s3 + $0x3c] sm:$0xf]
          %v634 = vld [vmem:[%s4] sm:$0x1]
          %v651 = vunpack.c.l.b16 %v618
          %v652 = vunpack.c.l.b16 %v619
          %v653 = vunpack.c.l.b16 %v620
          %v654 = vunpack.c.l.b16 %v621
          %v655 = vunpack.c.l.b16 %v622
          %v656 = vunpack.c.l.b16 %v623
          %v657 = vunpack.c.l.b16 %v624
          %v658 = vunpack.c.l.b16 %v625
          %v659 = vunpack.c.l.b16 %v626
          %v660 = vunpack.c.l.b16 %v627
          %v661 = vunpack.c.l.b16 %v628
          %v662 = vunpack.c.l.b16 %v629
          %v663 = vunpack.c.l.b16 %v630
          %v664 = vunpack.c.l.b16 %v631
          %v665 = vunpack.c.l.b16 %v632
          %v666 = vunpack.c.l.b16 %v633
          %v667 = vpack.c.b16 %v652, %v651
          %v668 = vpack.c.b16 %v654, %v653
          %v669 = vpack.c.b16 %v656, %v655
          %v670 = vpack.c.b16 %v658, %v657
          %v671 = vpack.c.b16 %v660, %v659
          %v672 = vpack.c.b16 %v662, %v661
          %v673 = vpack.c.b16 %v664, %v663
          %v674 = vpack.c.b16 %v666, %v665
          %683 = vmatpush.bf16.msra.mxu0 %v674
          %684 = vmatpush.bf16.msra.mxu0 %v673
          %685 = vmatpush.bf16.msra.mxu0 %v672
          %686 = vmatpush.bf16.msra.mxu0 %v671
          %687 = vmatpush.bf16.msra.mxu0 %v670
          %688 = vmatpush.bf16.msra.mxu0 %v669
          %689 = vmatpush.bf16.msra.mxu0 %v668
          %690 = vmatpush.bf16.msra.mxu0 %v667
          %691 = vmatmul.bf16.gmra.mxu0 %v617
          %v692 = vpop.f32.mrf.mxu0
          %v693 = vadd.f32 %v634, %v692
          %v694 = vpop.f32.mrf.mxu0
          %695 = vdwg.mxu0
          %696 = vst [vmem:[%s239] sm:$0x1] %v693
        $region48: #{generic_timm_model_forward.1} parent=39 // pred_fallthru
          _
        %s697 = sand.u32 %s151, 1
        %s698 = scalar_lea.sflag [#allocation4], %s697
        %s699 = sand.u32 %s151, 1
        %s700 = scalar_lea.vmem [#allocation3], %s699
        // Predicated region
        $region49: #{generic_timm_model_forward.1} parent=39 // pred_check
          %p701 = pneg %p161
        $region50: #{generic_timm_model_forward.1} parent=39 // pred_check_branch
          %703 = sbr.rel (%p701) target = $region52
        $region51: #{generic_timm_model_forward.1} parent=39 // pred_region
          %705 = vsyncadd %s698, 0
          %s706 = scalar_lea.hbm %s5, %s23
          %s708 = sshll.u32 %s700, 4
          %s709 = int_to_ptr.vmem [resolvable:$true] %s708
          %s710 = sshll.u32 %s706, 4
          %s711 = int_to_ptr.hbm [resolvable:$true] %s710
          %713 = dma.vmem_to_hbm [thread:$0]  %s709, 16, %s711, %s698
        $region52: #{generic_timm_model_forward.1} parent=39 // pred_fallthru
          _
      $region40: #{generic_timm_model_forward.1} parent=5 // pred_fallthru
        _
      %p714 = scmp.le.s32.totalorder 2, %s14
      // Predicated region
      $region53: #{generic_timm_model_forward.1} parent=5 // pred_check
        %p715 = pneg %p714
      $region54: #{generic_timm_model_forward.1} parent=5 // pred_check_branch
        %717 = sbr.rel (%p715) target = $region56
      $region55: #{generic_timm_model_forward.1} parent=5 // pred_region
        %s718 = ssub.s32 %s14, 2
        // Predicated region
        $region57: #{generic_timm_model_forward.1} parent=55 // pred_check
          %p719 = pneg %p167
        $region58: #{generic_timm_model_forward.1} parent=55 // pred_check_branch
          %721 = sbr.rel (%p719) target = $region60
        $region59: #{generic_timm_model_forward.1} parent=55 // pred_region
          %s722 = sand.u32 %s152, 1
          %s723 = scalar_lea.sflag [#allocation4], %s722
          %s724 = sand.u32 %s152, 1
          %s725 = scalar_lea.vmem [#allocation3], %s724
          %727 = dma.done %s723, 16
        $region60: #{generic_timm_model_forward.1} parent=55 // pred_fallthru
          _
      $region56: #{generic_timm_model_forward.1} parent=5 // pred_fallthru
        _
    $region6: #{generic_timm_model_forward.1} parent=1 // loop_footer
      %s18 = sadd.s32 1, %s14
    $region7: #{generic_timm_model_forward.1} parent=1 // loop_footer_branch
      %13 = sbr.rel target = $region3
    $region8: #{generic_timm_model_forward.1} parent=1 // loop_exit
      _
    %728 = vsyncpa [#allocation4], 1
    %s729 = scalar_lea.sflag [#allocation4], 1
    %730 = vsyncpa %s729, 1

</llo_original>
